<compile_context>
chip_gen: v7x
topology: tpu7x:2x2x1
jax: 0.10.0
libtpu: 0.0.40
codegen_flags: <defaults>
</compile_context>

<pallas_src>
import functools

import jax
import jax.numpy as jnp
from jax.experimental import pallas as pl
from jax.experimental.pallas import tpu as pltpu


# ----------------------------- fused Pallas kernel -----------------------------

def _projnet_fused_kernel(x_ref, pwT_ref, pb_ref, cwT_ref, cb_ref,
                          fcT_ref, fb_ref, o_ref, *, H, W):
    HW = H * W

    # ---- proj: 1x1 conv == channel matmul + bias + ReLU (f32, K is tiny) ----
    h = jnp.dot(pwT_ref[...], x_ref[0], preferred_element_type=jnp.float32)
    h = jnp.maximum(h + pb_ref[...], 0.0)                      # (C_proj, HW)

    # ---- lane-index boundary masks for the 3x3 (pad=1) taps ----
    lane = jax.lax.broadcasted_iota(jnp.int32, (1, HW), 1)
    col = lane % W
    left_edge = col == 0            # x-1 out of bounds
    right_edge = col == W - 1       # x+1 out of bounds
    top_row = lane < W              # y-1 out of bounds
    bot_row = lane >= HW - W        # y+1 out of bounds

    # ---- dx-shifted copies of h: XLU lane rotations + edge masks ----
    # roll(h, k)[n] = h[n - k]; the masks zero exactly the wrapped /
    # out-of-bounds lanes.  Column masks commute with the later row rolls
    # (which are multiples of W), so they can be applied once, here.
    hx0 = jnp.where(left_edge, 0.0, pltpu.roll(h, 1, axis=1))          # dx = 0
    hx2 = jnp.where(right_edge, 0.0, pltpu.roll(h, HW - 1, axis=1))    # dx = 2
    hx = jnp.concatenate([hx0, h, hx2], axis=0)                # (3*C_proj, HW)

    # ---- 3x3 conv: 3 merged-K (K = 3*C_proj) bf16 MXU matmuls, register acc --
    acc = None
    for dy in range(3):
        shift = ((1 - dy) * W) % HW
        t = pltpu.roll(hx, shift, axis=1) if shift else hx
        if dy == 0:
            t = jnp.where(top_row, 0.0, t)
        elif dy == 2:
            t = jnp.where(bot_row, 0.0, t)
        d = jnp.dot(cwT_ref[dy], t.astype(jnp.bfloat16),
                    preferred_element_type=jnp.float32)        # (C_disc, HW)
        acc = d if acc is None else acc + d
    g = jnp.maximum(acc + cb_ref[...], 0.0)                    # (C_disc, HW)

    # ---- head: fc weights already carry the 1/(H*W) pooling scale ----
    part = jnp.dot(fcT_ref[...], g, preferred_element_type=jnp.float32)
    logits = jnp.sum(part, axis=1, keepdims=True) + fb_ref[...]   # (ncls, 1)
    o_ref[...] = logits[None, :, :]


# ------------------------------- wrapper (JAX) -------------------------------

@jax.jit
def projnet_forward(x_nchw, params):
    B, C, H, W = x_nchw.shape
    HW = H * W
    c_proj = params["proj_w"].shape[1]
    c_disc = params["disc_conv_w"].shape[-1]
    num_classes = params["fc_w"].shape[1]

    # (C, HW) orientation: free reshape of NCHW, no transpose / extra HBM pass.
    x = x_nchw.reshape(B, C, HW)

    pwT = params["proj_w"].T                                    # (C_proj, C_in)
    pb = params["proj_b"].reshape(c_proj, 1)
    # Stack the 3 dx taps along the contraction axis per dy:
    #   cwT[dy, co, dx*C_proj + ci] = w[dy, dx, ci, co]
    cwT = jnp.transpose(params["disc_conv_w"], (0, 3, 1, 2)).reshape(
        3, c_disc, 3 * c_proj).astype(jnp.bfloat16)
    cb = params["disc_conv_b"].reshape(c_disc, 1)
    fcT = params["fc_w"].T / float(HW)        # fold global-avg-pool scale in
    fb = params["fc_b"].reshape(num_classes, 1)

    kernel = functools.partial(_projnet_fused_kernel, H=H, W=W)
    out = pl.pallas_call(
        kernel,
        out_shape=jax.ShapeDtypeStruct((B, num_classes, 1), jnp.float32),
        grid=(B,),
        in_specs=[
            pl.BlockSpec((1, C, HW), lambda b: (b, 0, 0)),
            pl.BlockSpec((c_proj, C), lambda b: (0, 0)),
            pl.BlockSpec((c_proj, 1), lambda b: (0, 0)),
            pl.BlockSpec((3, c_disc, 3 * c_proj), lambda b: (0, 0, 0)),
            pl.BlockSpec((c_disc, 1), lambda b: (0, 0)),
            pl.BlockSpec((num_classes, c_disc), lambda b: (0, 0)),
            pl.BlockSpec((num_classes, 1), lambda b: (0, 0)),
        ],
        out_specs=pl.BlockSpec((1, num_classes, 1), lambda b: (b, 0, 0)),
        compiler_params=pltpu.CompilerParams(
            dimension_semantics=("parallel",)),     # feeds both v7x TCs
    )(x, pwT, pb, cwT, cb, fcT, fb)
    # TODO(synk): for larger batches, tile several images per grid step (stack
    # them along the lane axis, masks already handle per-image boundaries) to
    # amortize the ~0.35us/step pipeline overhead; with B=2 one image per step
    # keeps >=1 step per v7x core, per the review.
    return out[:, :, 0]


def init_params(key, c_in=4, c_proj=32, c_disc=32, num_classes=10):
    k = jax.random.split(key, 6)
    s = 0.1
    return {
        # proj: 1x1 conv == channel matmul
        "proj_w": s * jax.random.normal(k[0], (c_in, c_proj), jnp.float32),
        "proj_b": s * jax.random.normal(k[1], (c_proj,), jnp.float32),
        # discriminator 3x3 conv, HWIO
        "disc_conv_w": s * jax.random.normal(k[2], (3, 3, c_proj, c_disc),
                                             jnp.float32),
        "disc_conv_b": s * jax.random.normal(k[3], (c_disc,), jnp.float32),
        # classifier head
        "fc_w": s * jax.random.normal(k[4], (c_disc, num_classes), jnp.float32),
        "fc_b": s * jax.random.normal(k[5], (num_classes,), jnp.float32),
    }


def projnet_reference(x_nchw, params):
    """Pure-JAX f32 reference (independent conv path) for correctness check."""
    x = jnp.transpose(x_nchw, (0, 2, 3, 1))
    h = jnp.maximum(jnp.einsum("bhwc,cd->bhwd", x, params["proj_w"])
                    + params["proj_b"], 0.0)
    g = jax.lax.conv_general_dilated(
        h, params["disc_conv_w"], window_strides=(1, 1), padding="SAME",
        dimension_numbers=("NHWC", "HWIO", "NHWC"))
    g = jnp.maximum(g + params["disc_conv_b"], 0.0)
    pooled = jnp.mean(g, axis=(1, 2))
    return pooled @ params["fc_w"] + params["fc_b"]


# --------------------------------- main ------------------------------------

if __name__ == "__main__":
    key = jax.random.PRNGKey(0)
    k_x, k_p = jax.random.split(key)

    B, C, H, W = 2, 4, 16, 16
    num_classes = 10
    x = jax.random.normal(k_x, (B, C, H, W), jnp.float32)      # NCHW like PyTorch
    params = init_params(k_p, c_in=C, num_classes=num_classes)

    out = jax.block_until_ready(projnet_forward(x, params))
    assert out.shape == (B, num_classes), out.shape

    ref = projnet_reference(x, params)
    # Conv matmuls use bf16 MXU inputs (f32 accumulate) -> slightly loosened tol.
    assert jnp.allclose(out, ref, atol=1e-2, rtol=1e-2), (
        float(jnp.max(jnp.abs(out - ref))))

    print("KERNEL_OK")
</pallas_src>

<mosaic_0001>
module attributes {stable_mosaic.version = 11 : i64} {
  func.func @_projnet_fused_kernel(%arg0: i32, %arg1: memref<1x4x256xf32, #tpu.memory_space<vmem>>, %arg2: memref<32x4xf32, #tpu.memory_space<vmem>>, %arg3: memref<32x1xf32, #tpu.memory_space<vmem>>, %arg4: memref<3x32x96xbf16, #tpu.memory_space<vmem>>, %arg5: memref<32x1xf32, #tpu.memory_space<vmem>>, %arg6: memref<10x32xf32, #tpu.memory_space<vmem>>, %arg7: memref<10x1xf32, #tpu.memory_space<vmem>>, %arg8: memref<1x10x1xf32, #tpu.memory_space<vmem>>) attributes {dimension_semantics = [#tpu.dimension_semantics<parallel>], iteration_bounds = array<i64: 2>, scalar_prefetch = 0 : i64, scratch_operands = 0 : i64, tpu.core_type = #tpu.core_type<tc>, window_params = [{transform_indices = @transform_0, window_bounds = array<i64: 1, 4, 256>}, {pipeline_mode = #tpu.pipeline_mode<synchronous>, transform_indices = @transform_1, window_bounds = array<i64: 32, 4>}, {pipeline_mode = #tpu.pipeline_mode<synchronous>, transform_indices = @transform_2, window_bounds = array<i64: 32, 1>}, {pipeline_mode = #tpu.pipeline_mode<synchronous>, transform_indices = @transform_3, window_bounds = array<i64: 3, 32, 96>}, {pipeline_mode = #tpu.pipeline_mode<synchronous>, transform_indices = @transform_4, window_bounds = array<i64: 32, 1>}, {pipeline_mode = #tpu.pipeline_mode<synchronous>, transform_indices = @transform_5, window_bounds = array<i64: 10, 32>}, {pipeline_mode = #tpu.pipeline_mode<synchronous>, transform_indices = @transform_6, window_bounds = array<i64: 10, 1>}, {transform_indices = @transform_7, window_bounds = array<i64: 1, 10, 1>}]} {
    %c0 = arith.constant 0 : index
    %c0_0 = arith.constant 0 : index
    %0 = vector.load %arg2[%c0, %c0_0] : memref<32x4xf32, #tpu.memory_space<vmem>>, vector<32x4xf32>
    %c0_1 = arith.constant 0 : index
    %c0_2 = arith.constant 0 : index
    %c0_3 = arith.constant 0 : index
    %1 = vector.load %arg1[%c0_1, %c0_2, %c0_3] : memref<1x4x256xf32, #tpu.memory_space<vmem>>, vector<1x4x256xf32>
    %2 = vector.shape_cast %1 : vector<1x4x256xf32> to vector<4x256xf32>
    %cst = arith.constant dense<0.000000e+00> : vector<32x256xf32>
    %3 = tpu.matmul %0, %2, %cst {dimension_numbers = #tpu.dot_dimension_numbers<[1], [0], [0], [1], [0, 0, 1, 1], [], []>} : vector<32x4xf32>, vector<4x256xf32>, vector<32x256xf32> -> vector<32x256xf32>
    %c0_4 = arith.constant 0 : index
    %c0_5 = arith.constant 0 : index
    %4 = vector.load %arg3[%c0_4, %c0_5] : memref<32x1xf32, #tpu.memory_space<vmem>>, vector<32x1xf32>
    %5 = vector.broadcast %4 : vector<32x1xf32> to vector<32x256xf32>
    %6 = arith.addf %3, %5 : vector<32x256xf32>
    %cst_6 = arith.constant 0.000000e+00 : f32
    %7 = vector.broadcast %cst_6 : f32 to vector<32x256xf32>
    %8 = arith.maximumf %6, %7 : vector<32x256xf32>
    %9 = tpu.iota {dimensions = array<i32: 1>} : vector<1x256xi32>
    %c16_i32 = arith.constant 16 : i32
    %c0_i32 = arith.constant 0 : i32
    %10 = arith.cmpi eq, %c16_i32, %c0_i32 : i32
    %c1_i32 = arith.constant 1 : i32
    %11 = arith.select %10, %c1_i32, %c16_i32 : i32
    %12 = vector.broadcast %11 : i32 to vector<1x256xi32>
    %13 = arith.remsi %9, %12 : vector<1x256xi32>
    %c0_i32_7 = arith.constant 0 : i32
    %14 = vector.broadcast %c0_i32_7 : i32 to vector<1x256xi32>
    %15 = arith.cmpi ne, %13, %14 : vector<1x256xi32>
    %c0_i32_8 = arith.constant 0 : i32
    %16 = vector.broadcast %c0_i32_8 : i32 to vector<1x256xi32>
    %17 = arith.cmpi slt, %13, %16 : vector<1x256xi32>
    %c0_i32_9 = arith.constant 0 : i32
    %18 = arith.cmpi slt, %11, %c0_i32_9 : i32
    %19 = vector.broadcast %18 : i1 to vector<1x256xi1>
    %20 = vector.broadcast %19 : vector<1x256xi1> to vector<1x256xi1>
    %21 = arith.xori %17, %20 : vector<1x256xi1>
    %22 = arith.andi %21, %15 : vector<1x256xi1>
    %23 = vector.broadcast %11 : i32 to vector<1x256xi32>
    %24 = arith.addi %13, %23 : vector<1x256xi32>
    %25 = arith.select %22, %24, %13 : vector<1x256xi1>, vector<1x256xi32>
    %c0_i32_10 = arith.constant 0 : i32
    %26 = vector.broadcast %c0_i32_10 : i32 to vector<1x256xi32>
    %27 = arith.cmpi eq, %25, %26 : vector<1x256xi32>
    %c15_i32 = arith.constant 15 : i32
    %28 = vector.broadcast %c15_i32 : i32 to vector<1x256xi32>
    %29 = arith.cmpi eq, %25, %28 : vector<1x256xi32>
    %c16_i32_11 = arith.constant 16 : i32
    %30 = vector.broadcast %c16_i32_11 : i32 to vector<1x256xi32>
    %31 = arith.cmpi slt, %9, %30 : vector<1x256xi32>
    %c240_i32 = arith.constant 240 : i32
    %32 = vector.broadcast %c240_i32 : i32 to vector<1x256xi32>
    %33 = arith.cmpi sge, %9, %32 : vector<1x256xi32>
    %c1_i32_12 = arith.constant 1 : i32
    %34 = tpu.dynamic_rotate %8 by %c1_i32_12 dim 1 : vector<32x256xf32>, i32 -> vector<32x256xf32>
    %cst_13 = arith.constant 0.000000e+00 : f32
    %35 = vector.shape_cast %27 : vector<1x256xi1> to vector<1x256xi1>
    %36 = vector.broadcast %35 : vector<1x256xi1> to vector<32x256xi1>
    %37 = vector.broadcast %cst_13 : f32 to vector<32x256xf32>
    %38 = arith.select %36, %37, %34 : vector<32x256xi1>, vector<32x256xf32>
    %c255_i32 = arith.constant 255 : i32
    %39 = tpu.dynamic_rotate %8 by %c255_i32 dim 1 : vector<32x256xf32>, i32 -> vector<32x256xf32>
    %cst_14 = arith.constant 0.000000e+00 : f32
    %40 = vector.shape_cast %29 : vector<1x256xi1> to vector<1x256xi1>
    %41 = vector.broadcast %40 : vector<1x256xi1> to vector<32x256xi1>
    %42 = vector.broadcast %cst_14 : f32 to vector<32x256xf32>
    %43 = arith.select %41, %42, %39 : vector<32x256xi1>, vector<32x256xf32>
    %44 = tpu.concatenate %38, %8, %43 in 0 : vector<32x256xf32>, vector<32x256xf32>, vector<32x256xf32> -> vector<96x256xf32>
    %c16_i32_15 = arith.constant 16 : i32
    %45 = tpu.dynamic_rotate %44 by %c16_i32_15 dim 1 : vector<96x256xf32>, i32 -> vector<96x256xf32>
    %cst_16 = arith.constant 0.000000e+00 : f32
    %46 = vector.shape_cast %31 : vector<1x256xi1> to vector<1x256xi1>
    %47 = vector.broadcast %46 : vector<1x256xi1> to vector<96x256xi1>
    %48 = vector.broadcast %cst_16 : f32 to vector<96x256xf32>
    %49 = arith.select %47, %48, %45 : vector<96x256xi1>, vector<96x256xf32>
    %c0_17 = arith.constant 0 : index
    %c0_18 = arith.constant 0 : index
    %c0_19 = arith.constant 0 : index
    %50 = vector.load %arg4[%c0_17, %c0_18, %c0_19] : memref<3x32x96xbf16, #tpu.memory_space<vmem>>, vector<1x32x96xbf16>
    %51 = vector.shape_cast %50 : vector<1x32x96xbf16> to vector<32x96xbf16>
    %52 = arith.truncf %49 : vector<96x256xf32> to vector<96x256xbf16>
    %cst_20 = arith.constant dense<0.000000e+00> : vector<32x256xf32>
    %53 = tpu.matmul %51, %52, %cst_20 {dimension_numbers = #tpu.dot_dimension_numbers<[1], [0], [0], [1], [0, 0, 1, 1], [], []>} : vector<32x96xbf16>, vector<96x256xbf16>, vector<32x256xf32> -> vector<32x256xf32>
    %c1 = arith.constant 1 : index
    %c0_21 = arith.constant 0 : index
    %c0_22 = arith.constant 0 : index
    %54 = vector.load %arg4[%c1, %c0_21, %c0_22] : memref<3x32x96xbf16, #tpu.memory_space<vmem>>, vector<1x32x96xbf16>
    %55 = vector.shape_cast %54 : vector<1x32x96xbf16> to vector<32x96xbf16>
    %56 = arith.truncf %44 : vector<96x256xf32> to vector<96x256xbf16>
    %cst_23 = arith.constant dense<0.000000e+00> : vector<32x256xf32>
    %57 = tpu.matmul %55, %56, %cst_23 {dimension_numbers = #tpu.dot_dimension_numbers<[1], [0], [0], [1], [0, 0, 1, 1], [], []>} : vector<32x96xbf16>, vector<96x256xbf16>, vector<32x256xf32> -> vector<32x256xf32>
    %58 = arith.addf %53, %57 : vector<32x256xf32>
    %c240_i32_24 = arith.constant 240 : i32
    %59 = tpu.dynamic_rotate %44 by %c240_i32_24 dim 1 : vector<96x256xf32>, i32 -> vector<96x256xf32>
    %cst_25 = arith.constant 0.000000e+00 : f32
    %60 = vector.shape_cast %33 : vector<1x256xi1> to vector<1x256xi1>
    %61 = vector.broadcast %60 : vector<1x256xi1> to vector<96x256xi1>
    %62 = vector.broadcast %cst_25 : f32 to vector<96x256xf32>
    %63 = arith.select %61, %62, %59 : vector<96x256xi1>, vector<96x256xf32>
    %c2 = arith.constant 2 : index
    %c0_26 = arith.constant 0 : index
    %c0_27 = arith.constant 0 : index
    %64 = vector.load %arg4[%c2, %c0_26, %c0_27] : memref<3x32x96xbf16, #tpu.memory_space<vmem>>, vector<1x32x96xbf16>
    %65 = vector.shape_cast %64 : vector<1x32x96xbf16> to vector<32x96xbf16>
    %66 = arith.truncf %63 : vector<96x256xf32> to vector<96x256xbf16>
    %cst_28 = arith.constant dense<0.000000e+00> : vector<32x256xf32>
    %67 = tpu.matmul %65, %66, %cst_28 {dimension_numbers = #tpu.dot_dimension_numbers<[1], [0], [0], [1], [0, 0, 1, 1], [], []>} : vector<32x96xbf16>, vector<96x256xbf16>, vector<32x256xf32> -> vector<32x256xf32>
    %68 = arith.addf %58, %67 : vector<32x256xf32>
    %c0_29 = arith.constant 0 : index
    %c0_30 = arith.constant 0 : index
    %69 = vector.load %arg5[%c0_29, %c0_30] : memref<32x1xf32, #tpu.memory_space<vmem>>, vector<32x1xf32>
    %70 = vector.broadcast %69 : vector<32x1xf32> to vector<32x256xf32>
    %71 = arith.addf %68, %70 : vector<32x256xf32>
    %cst_31 = arith.constant 0.000000e+00 : f32
    %72 = vector.broadcast %cst_31 : f32 to vector<32x256xf32>
    %73 = arith.maximumf %71, %72 : vector<32x256xf32>
    %c0_32 = arith.constant 0 : index
    %c0_33 = arith.constant 0 : index
    %74 = vector.load %arg6[%c0_32, %c0_33] : memref<10x32xf32, #tpu.memory_space<vmem>>, vector<10x32xf32>
    %cst_34 = arith.constant dense<0.000000e+00> : vector<10x256xf32>
    %75 = tpu.matmul %74, %73, %cst_34 {dimension_numbers = #tpu.dot_dimension_numbers<[1], [0], [0], [1], [0, 0, 1, 1], [], []>} : vector<10x32xf32>, vector<32x256xf32>, vector<10x256xf32> -> vector<10x256xf32>
    %cst_35 = arith.constant dense<0.000000e+00> : vector<10xf32>
    %76 = vector.multi_reduction <add>, %75, %cst_35 [1] : vector<10x256xf32> to vector<10xf32>
    %77 = vector.shape_cast %76 : vector<10xf32> to vector<10x1xf32>
    %c0_36 = arith.constant 0 : index
    %c0_37 = arith.constant 0 : index
    %78 = vector.load %arg7[%c0_36, %c0_37] : memref<10x1xf32, #tpu.memory_space<vmem>>, vector<10x1xf32>
    %79 = arith.addf %77, %78 : vector<10x1xf32>
    %80 = vector.shape_cast %79 : vector<10x1xf32> to vector<1x10x1xf32>
    %c0_38 = arith.constant 0 : index
    %c0_39 = arith.constant 0 : index
    %c0_40 = arith.constant 0 : index
    %81 = vector.load %arg8[%c0_38, %c0_39, %c0_40] : memref<1x10x1xf32, #tpu.memory_space<vmem>>, vector<1x10x1xf32>
    tpu.vector_store %arg8[%c0_38, %c0_39, %c0_40], %80 {strides = array<i32>} : memref<1x10x1xf32, #tpu.memory_space<vmem>>, vector<1x10x1xf32>,
    return
  }
  func.func @transform_0(%arg0: i32) -> (i32, i32, i32) {
    %c0_i32 = arith.constant 0 : i32
    %c0_i32_0 = arith.constant 0 : i32
    %c0_i32_1 = arith.constant 0 : i32
    return %arg0, %c0_i32, %c0_i32_0 : i32, i32, i32
  }
  func.func @transform_1(%arg0: i32) -> (i32, i32) {
    %c0_i32 = arith.constant 0 : i32
    %c0_i32_0 = arith.constant 0 : i32
    %c0_i32_1 = arith.constant 0 : i32
    return %c0_i32, %c0_i32_0 : i32, i32
  }
  func.func @transform_2(%arg0: i32) -> (i32, i32) {
    %c0_i32 = arith.constant 0 : i32
    %c0_i32_0 = arith.constant 0 : i32
    %c0_i32_1 = arith.constant 0 : i32
    return %c0_i32, %c0_i32_0 : i32, i32
  }
  func.func @transform_3(%arg0: i32) -> (i32, i32, i32) {
    %c0_i32 = arith.constant 0 : i32
    %c0_i32_0 = arith.constant 0 : i32
    %c0_i32_1 = arith.constant 0 : i32
    %c0_i32_2 = arith.constant 0 : i32
    return %c0_i32, %c0_i32_0, %c0_i32_1 : i32, i32, i32
  }
  func.func @transform_4(%arg0: i32) -> (i32, i32) {
    %c0_i32 = arith.constant 0 : i32
    %c0_i32_0 = arith.constant 0 : i32
    %c0_i32_1 = arith.constant 0 : i32
    return %c0_i32, %c0_i32_0 : i32, i32
  }
  func.func @transform_5(%arg0: i32) -> (i32, i32) {
    %c0_i32 = arith.constant 0 : i32
    %c0_i32_0 = arith.constant 0 : i32
    %c0_i32_1 = arith.constant 0 : i32
    return %c0_i32, %c0_i32_0 : i32, i32
  }
  func.func @transform_6(%arg0: i32) -> (i32, i32) {
    %c0_i32 = arith.constant 0 : i32
    %c0_i32_0 = arith.constant 0 : i32
    %c0_i32_1 = arith.constant 0 : i32
    return %c0_i32, %c0_i32_0 : i32, i32
  }
  func.func @transform_7(%arg0: i32) -> (i32, i32, i32) {
    %c0_i32 = arith.constant 0 : i32
    %c0_i32_0 = arith.constant 0 : i32
    %c0_i32_1 = arith.constant 0 : i32
    return %arg0, %c0_i32, %c0_i32_0 : i32, i32, i32
  }
}

</mosaic_0001>

<llo_original>
// kernel: projnet_forward.1
$region0: #{projnet_forward.1}
  #allocation0 [shape = 'u32[]', space=smem, size = 0x4, offset = 0x4, fixed_abs, tag = 'smem constant byte address 0x4 - core index']
  #allocation1 [shape = 'u32[144,128]{1,0:T(1,128)}', space=vmem, size = 0x12000, scoped, tag = 'internal scratch']
  %s0 = inlined_call_operand.vmem [shape: f32[2,4,256], index: 0, kind: input, shape index: {}]
  %s1 = inlined_call_operand.vmem [shape: f32[32,4], index: 1, kind: input, shape index: {}]
  %s2 = inlined_call_operand.vmem [shape: f32[32,1], index: 2, kind: input, shape index: {}]
  %s3 = inlined_call_operand.vmem [shape: bf16[3,32,96], index: 3, kind: input, shape index: {}]
  %s4 = inlined_call_operand.vmem [shape: f32[32,1], index: 4, kind: input, shape index: {}]
  %s5 = inlined_call_operand.vmem [shape: f32[10,32], index: 5, kind: input, shape index: {}]
  %s6 = inlined_call_operand.vmem [shape: f32[10,1], index: 6, kind: input, shape index: {}]
  %s7 = inlined_call_operand.vmem [shape: f32[2,10,1], index: 7, kind: output, shape index: {}]
  %s8 = sld [smem:[#allocation0]]
  $region61: #{projnet_forward.1} parent=0
    _
  %s10 = ssub.s32 1, %s8
  %s11 = scalar_select 0, %s10, %s8
  loop: start=0, step=1, limit=4
  $region2: #{projnet_forward.1} parent=0 // loop_pre_header
    _
  $region3: #{projnet_forward.1} parent=0 // loop_header
    %s13 = sphi 0, %s17
    %p14 = scmp.ge.s32.totalorder %s13, 4
    %s23 = sphi 0, %s25
    %s26 = sphi 0, %s23
    %s27 = sphi 0, %s26
    %s43 = sphi 0, %s27
    %s47 = sphi 0, %s47
    %s49 = sphi 0, %s47
    %s50 = sphi 0, %s49
    %s64 = sphi 0, %s50
    %s68 = sphi 0, %s68
    %s70 = sphi 0, %s68
    %s71 = sphi 0, %s70
    %s85 = sphi 0, %s71
    %s89 = sphi 0, %s89
    %s91 = sphi 0, %s89
    %s92 = sphi 0, %s91
    %s106 = sphi 0, %s92
    %s110 = sphi 0, %s110
    %s112 = sphi 0, %s110
    %s113 = sphi 0, %s112
    %s127 = sphi 0, %s113
    %s131 = sphi 0, %s131
    %s133 = sphi 0, %s131
    %s134 = sphi 0, %s133
    %s148 = sphi 0, %s134
    %s152 = sphi 0, %s152
    %s154 = sphi 0, %s152
    %s155 = sphi 0, %s154
    %s169 = sphi 0, %s155
    %s175 = sphi 0, %s177
    %s178 = sphi 0, %s175
    %s179 = sphi 0, %s178
    %s195 = sphi 0, %s179
  $region4: #{projnet_forward.1} parent=0 // loop_header_branch
    %16 = sbr.rel (%p14) target = $region8
  $region5: #{projnet_forward.1} parent=0 // loop_body
    %s18 = ssub.s32 %s13, 1
    %s19 = ssub.s32 %s13, 2
    %s20 = sadd.s32 %s13, 1
    %s21 = ssub.s32 %s13, %s20
    %p22 = scmp.eq.s32.totalorder %s21, 0
    %s24 = sadd.s32 %s23, 1
    %s25 = scalar_select %p22, %s23, %s24
    %p28 = pneg %p22
    %p29 = scmp.eq.s32.totalorder %s13, 1
    %p30 = por %p28, %p29
    %p31 = scmp.ne.s32.totalorder %s23, %s26
    %p32 = scmp.eq.s32.totalorder %s13, 0
    %p33 = por %p31, %p32
    %p34 = scmp.ne.s32.totalorder %s23, %s26
    %p35 = scmp.eq.s32.totalorder %s18, 1
    %p36 = por %p34, %p35
    %p37 = scmp.ne.s32.totalorder %s26, %s27
    %p38 = scmp.eq.s32.totalorder %s18, 0
    %p39 = por %p37, %p38
    %p40 = scmp.ne.s32.totalorder %s26, %s27
    %p41 = scmp.eq.s32.totalorder %s19, 1
    %p42 = por %p40, %p41
    %p44 = scmp.ne.s32.totalorder %s27, %s43
    %p45 = scmp.eq.s32.totalorder %s19, 0
    %p46 = por %p44, %p45
    %s48 = sadd.s32 %s47, 1
    %p51 = scmp.eq.s32.totalorder %s13, 1
    %p52 = scmp.ne.s32.totalorder %s47, %s49
    %p53 = scmp.eq.s32.totalorder %s13, 0
    %p54 = por %p52, %p53
    %p55 = scmp.ne.s32.totalorder %s47, %s49
    %p56 = scmp.eq.s32.totalorder %s18, 1
    %p57 = por %p55, %p56
    %p58 = scmp.ne.s32.totalorder %s49, %s50
    %p59 = scmp.eq.s32.totalorder %s18, 0
    %p60 = por %p58, %p59
    %p61 = scmp.ne.s32.totalorder %s49, %s50
    %p62 = scmp.eq.s32.totalorder %s19, 1
    %p63 = por %p61, %p62
    %p65 = scmp.ne.s32.totalorder %s50, %s64
    %p66 = scmp.eq.s32.totalorder %s19, 0
    %p67 = por %p65, %p66
    %s69 = sadd.s32 %s68, 1
    %p72 = scmp.eq.s32.totalorder %s13, 1
    %p73 = scmp.ne.s32.totalorder %s68, %s70
    %p74 = scmp.eq.s32.totalorder %s13, 0
    %p75 = por %p73, %p74
    %p76 = scmp.ne.s32.totalorder %s68, %s70
    %p77 = scmp.eq.s32.totalorder %s18, 1
    %p78 = por %p76, %p77
    %p79 = scmp.ne.s32.totalorder %s70, %s71
    %p80 = scmp.eq.s32.totalorder %s18, 0
    %p81 = por %p79, %p80
    %p82 = scmp.ne.s32.totalorder %s70, %s71
    %p83 = scmp.eq.s32.totalorder %s19, 1
    %p84 = por %p82, %p83
    %p86 = scmp.ne.s32.totalorder %s71, %s85
    %p87 = scmp.eq.s32.totalorder %s19, 0
    %p88 = por %p86, %p87
    %s90 = sadd.s32 %s89, 1
    %p93 = scmp.eq.s32.totalorder %s13, 1
    %p94 = scmp.ne.s32.totalorder %s89, %s91
    %p95 = scmp.eq.s32.totalorder %s13, 0
    %p96 = por %p94, %p95
    %p97 = scmp.ne.s32.totalorder %s89, %s91
    %p98 = scmp.eq.s32.totalorder %s18, 1
    %p99 = por %p97, %p98
    %p100 = scmp.ne.s32.totalorder %s91, %s92
    %p101 = scmp.eq.s32.totalorder %s18, 0
    %p102 = por %p100, %p101
    %p103 = scmp.ne.s32.totalorder %s91, %s92
    %p104 = scmp.eq.s32.totalorder %s19, 1
    %p105 = por %p103, %p104
    %p107 = scmp.ne.s32.totalorder %s92, %s106
    %p108 = scmp.eq.s32.totalorder %s19, 0
    %p109 = por %p107, %p108
    %s111 = sadd.s32 %s110, 1
    %p114 = scmp.eq.s32.totalorder %s13, 1
    %p115 = scmp.ne.s32.totalorder %s110, %s112
    %p116 = scmp.eq.s32.totalorder %s13, 0
    %p117 = por %p115, %p116
    %p118 = scmp.ne.s32.totalorder %s110, %s112
    %p119 = scmp.eq.s32.totalorder %s18, 1
    %p120 = por %p118, %p119
    %p121 = scmp.ne.s32.totalorder %s112, %s113
    %p122 = scmp.eq.s32.totalorder %s18, 0
    %p123 = por %p121, %p122
    %p124 = scmp.ne.s32.totalorder %s112, %s113
    %p125 = scmp.eq.s32.totalorder %s19, 1
    %p126 = por %p124, %p125
    %p128 = scmp.ne.s32.totalorder %s113, %s127
    %p129 = scmp.eq.s32.totalorder %s19, 0
    %p130 = por %p128, %p129
    %s132 = sadd.s32 %s131, 1
    %p135 = scmp.eq.s32.totalorder %s13, 1
    %p136 = scmp.ne.s32.totalorder %s131, %s133
    %p137 = scmp.eq.s32.totalorder %s13, 0
    %p138 = por %p136, %p137
    %p139 = scmp.ne.s32.totalorder %s131, %s133
    %p140 = scmp.eq.s32.totalorder %s18, 1
    %p141 = por %p139, %p140
    %p142 = scmp.ne.s32.totalorder %s133, %s134
    %p143 = scmp.eq.s32.totalorder %s18, 0
    %p144 = por %p142, %p143
    %p145 = scmp.ne.s32.totalorder %s133, %s134
    %p146 = scmp.eq.s32.totalorder %s19, 1
    %p147 = por %p145, %p146
    %p149 = scmp.ne.s32.totalorder %s134, %s148
    %p150 = scmp.eq.s32.totalorder %s19, 0
    %p151 = por %p149, %p150
    %s153 = sadd.s32 %s152, 1
    %p156 = scmp.eq.s32.totalorder %s13, 1
    %p157 = scmp.ne.s32.totalorder %s152, %s154
    %p158 = scmp.eq.s32.totalorder %s13, 0
    %p159 = por %p157, %p158
    %p160 = scmp.ne.s32.totalorder %s152, %s154
    %p161 = scmp.eq.s32.totalorder %s18, 1
    %p162 = por %p160, %p161
    %p163 = scmp.ne.s32.totalorder %s154, %s155
    %p164 = scmp.eq.s32.totalorder %s18, 0
    %p165 = por %p163, %p164
    %p166 = scmp.ne.s32.totalorder %s154, %s155
    %p167 = scmp.eq.s32.totalorder %s19, 1
    %p168 = por %p166, %p167
    %p170 = scmp.ne.s32.totalorder %s155, %s169
    %p171 = scmp.eq.s32.totalorder %s19, 0
    %p172 = por %p170, %p171
    %s173 = ssub.s32 %s13, %s20
    %p174 = scmp.eq.s32.totalorder %s173, 0
    %s176 = sadd.s32 %s175, 1
    %s177 = scalar_select %p174, %s175, %s176
    %p180 = pneg %p174
    %p181 = scmp.eq.s32.totalorder %s13, 1
    %p182 = por %p180, %p181
    %p183 = scmp.ne.s32.totalorder %s175, %s178
    %p184 = scmp.eq.s32.totalorder %s13, 0
    %p185 = por %p183, %p184
    %p186 = scmp.ne.s32.totalorder %s175, %s178
    %p187 = scmp.eq.s32.totalorder %s18, 1
    %p188 = por %p186, %p187
    %p189 = scmp.ne.s32.totalorder %s178, %s179
    %p190 = scmp.eq.s32.totalorder %s18, 0
    %p191 = por %p189, %p190
    %p192 = scmp.ne.s32.totalorder %s178, %s179
    %p193 = scmp.eq.s32.totalorder %s19, 1
    %p194 = por %p192, %p193
    %p196 = scmp.ne.s32.totalorder %s179, %s195
    %p197 = scmp.eq.s32.totalorder %s19, 0
    %p198 = por %p196, %p197
    %p199 = scmp.le.s32.totalorder 1, %s13
    %p200 = scmp.lt.s32.totalorder %s13, 3
    %p201 = pnand %p199, %p200
    %p202 = pneg %p201
    // Predicated region
    $region9: #{projnet_forward.1} parent=5 // pred_check
      _
    $region10: #{projnet_forward.1} parent=5 // pred_check_branch
      %204 = sbr.rel (%p201) target = $region12
    $region11: #{projnet_forward.1} parent=5 // pred_region
      %s205 = ssub.s32 %s13, 1
      // Predicated region
      $region13: #{projnet_forward.1} parent=11 // pred_check
        %p206 = pneg %p60
      $region14: #{projnet_forward.1} parent=11 // pred_check_branch
        %208 = sbr.rel (%p206) target = $region16
      $region15: #{projnet_forward.1} parent=11 // pred_region
        _
      $region16: #{projnet_forward.1} parent=11 // pred_fallthru
        _
      // Predicated region
      $region17: #{projnet_forward.1} parent=11 // pred_check
        %p209 = pneg %p81
      $region18: #{projnet_forward.1} parent=11 // pred_check_branch
        %211 = sbr.rel (%p209) target = $region20
      $region19: #{projnet_forward.1} parent=11 // pred_region
        _
      $region20: #{projnet_forward.1} parent=11 // pred_fallthru
        _
      // Predicated region
      $region21: #{projnet_forward.1} parent=11 // pred_check
        %p212 = pneg %p102
      $region22: #{projnet_forward.1} parent=11 // pred_check_branch
        %214 = sbr.rel (%p212) target = $region24
      $region23: #{projnet_forward.1} parent=11 // pred_region
        _
      $region24: #{projnet_forward.1} parent=11 // pred_fallthru
        _
      // Predicated region
      $region25: #{projnet_forward.1} parent=11 // pred_check
        %p215 = pneg %p123
      $region26: #{projnet_forward.1} parent=11 // pred_check_branch
        %217 = sbr.rel (%p215) target = $region28
      $region27: #{projnet_forward.1} parent=11 // pred_region
        _
      $region28: #{projnet_forward.1} parent=11 // pred_fallthru
        _
      // Predicated region
      $region29: #{projnet_forward.1} parent=11 // pred_check
        %p218 = pneg %p144
      $region30: #{projnet_forward.1} parent=11 // pred_check_branch
        %220 = sbr.rel (%p218) target = $region32
      $region31: #{projnet_forward.1} parent=11 // pred_region
        _
      $region32: #{projnet_forward.1} parent=11 // pred_fallthru
        _
      // Predicated region
      $region33: #{projnet_forward.1} parent=11 // pred_check
        %p221 = pneg %p165
      $region34: #{projnet_forward.1} parent=11 // pred_check_branch
        %223 = sbr.rel (%p221) target = $region36
      $region35: #{projnet_forward.1} parent=11 // pred_region
        _
      $region36: #{projnet_forward.1} parent=11 // pred_fallthru
        _
    $region12: #{projnet_forward.1} parent=5 // pred_fallthru
      _
    %p224 = scmp.lt.s32.totalorder %s13, 2
    // Predicated region
    $region37: #{projnet_forward.1} parent=5 // pred_check
      %p225 = pneg %p224
    $region38: #{projnet_forward.1} parent=5 // pred_check_branch
      %227 = sbr.rel (%p225) target = $region40
    $region39: #{projnet_forward.1} parent=5 // pred_region
      // Predicated region
      $region41: #{projnet_forward.1} parent=39 // pred_check
        %p228 = pneg %p33
      $region42: #{projnet_forward.1} parent=39 // pred_check_branch
        %230 = sbr.rel (%p228) target = $region44
      $region43: #{projnet_forward.1} parent=39 // pred_region
        %p231 = scmp.lt.s32.totalorder %s13, 1
        %s232 = scalar_select %p231, %s13, 1
        %s233 = smul.addr %s232, 2
        %s234 = smul.addr %s233, 4
        %s235 = scalar_lea.vmem %s0, %s234
      $region44: #{projnet_forward.1} parent=39 // pred_fallthru
        _
    $region40: #{projnet_forward.1} parent=5 // pred_fallthru
      _
    %p236 = scmp.le.s32.totalorder 1, %s13
    %p237 = scmp.lt.s32.totalorder %s13, 3
    %p238 = pnand %p236, %p237
    %p239 = pneg %p238
    // Predicated region
    $region45: #{projnet_forward.1} parent=5 // pred_check
      _
    $region46: #{projnet_forward.1} parent=5 // pred_check_branch
      %241 = sbr.rel (%p238) target = $region48
    $region47: #{projnet_forward.1} parent=5 // pred_region
      %s242 = ssub.s32 %s13, 1
      %p243 = scmp.lt.s32.totalorder %s18, 1
      %s244 = scalar_select %p243, %s18, 1
      %s245 = smul.addr %s244, 2
      %s246 = smul.addr %s245, 4
      %s247 = scalar_lea.vmem %s0, %s246
      %p248 = pneg %p39
      %p249 = pneg %p36
      %p250 = pneg %p60
      %p251 = pneg %p57
      %p252 = pneg %p81
      %p253 = pneg %p78
      %p254 = pneg %p102
      %p255 = pneg %p99
      %p256 = pneg %p123
      %p257 = pneg %p120
      %p258 = pneg %p144
      %p259 = pneg %p141
      %p260 = pneg %p165
      %p261 = pneg %p162
      %p262 = pneg %p191
      %p263 = pneg %p188
      %p264 = scmp.lt.s32.totalorder %s18, 1
      %s265 = scalar_select %p264, %s18, 1
      %s266 = smul.addr %s265, 2
      %s267 = smul.addr %s266, 8
      %s268 = scalar_lea.vmem %s7, %s267
      %p269 = scmp.lt.s32.totalorder %s18, 1
      %s270 = scalar_select %p269, %s18, 1
      %s271 = smul.addr %s270, 2
      %s272 = smul.addr %s271, 4
      %s273 = scalar_lea.vmem %s0, %s272
      %p274 = scmp.lt.s32.totalorder %s18, 1
      %s275 = scalar_select %p274, %s18, 1
      %s276 = smul.addr %s275, 2
      %s277 = smul.addr %s276, 8
      %s278 = scalar_lea.vmem %s7, %s277
      %v280 = vld [vmem:[%s1] sm:$0xff]
      %v281 = vld [vmem:[%s1 + $0x8] sm:$0xff]
      %v282 = vld [vmem:[%s1 + $0x10] sm:$0xff]
      %v283 = vld [vmem:[%s1 + $0x18] sm:$0xff]
      %v284 = vld [vmem:[%s273] sm:$0xff]
      %v285 = vld [vmem:[%s2] sm:$0xff]
      %v286 = vld [vmem:[%s2 + $0x8] sm:$0xff]
      %v287 = vld [vmem:[%s2 + $0x10] sm:$0xff]
      %v288 = vld [vmem:[%s2 + $0x18] sm:$0xff]
      %290 = vset.pattern.permute.xlu0 0
      %291 = vperm.xlu0 %290, %v285
      %v292 = vpop.permute.xlu0 %291
      %295 = vset.pattern.permute.xlu0 0
      %296 = vperm.xlu0 %295, %v286
      %v297 = vpop.permute.xlu0 %296
      %300 = vset.pattern.permute.xlu0 0
      %301 = vperm.xlu0 %300, %v287
      %v302 = vpop.permute.xlu0 %301
      %305 = vset.pattern.permute.xlu0 0
      %306 = vperm.xlu0 %305, %v288
      %v307 = vpop.permute.xlu0 %306
      %v310 = vcombine.high %v284, %v284
      %vm311 = vcmask 31744
      %v313 = vsel %vm311, %v280, 0
      %v316 = vsel %vm311, %v281, 0
      %v319 = vsel %vm311, %v282, 0
      %v322 = vsel %vm311, %v283, 0
      %vm324 = vcmask 1043456
      %v325 = vsel %vm324, %v284, 0
      %v327 = vsel %vm324, %v310, 0
      %329 = vmatprep.subr.mxu0 %v327
      %330 = vmatpush1.msra.mxu0 %v325
      %331 = vmatprep.subr.mxu0 0.0
      %332 = vmatpush1.msra.mxu0 0.0
      %333 = vmatprep.subr.mxu0 0.0
      %334 = vmatpush1.msra.mxu0 0.0
      %335 = vmatprep.subr.mxu0 0.0
      %336 = vmatpush1.msra.mxu0 0.0
      %337 = vmatprep.subr.mxu0 0.0
      %338 = vmatpush1.msra.mxu0 0.0
      %339 = vmatprep.subr.mxu0 0.0
      %340 = vmatpush1.msra.mxu0 0.0
      %341 = vmatprep.subr.mxu0 0.0
      %342 = vmatpush1.msra.mxu0 0.0
      %343 = vmatprep.subr.mxu0 0.0
      %344 = vmatpush1.msra.mxu0 0.0
      %345 = vmatprep.subr.mxu0 0.0
      %346 = vmatpush1.msra.mxu0 0.0
      %347 = vmatprep.subr.mxu0 0.0
      %348 = vmatpush1.msra.mxu0 0.0
      %349 = vmatprep.subr.mxu0 0.0
      %350 = vmatpush1.msra.mxu0 0.0
      %351 = vmatprep.subr.mxu0 0.0
      %352 = vmatpush1.msra.mxu0 0.0
      %353 = vmatprep.subr.mxu0 0.0
      %354 = vmatpush1.msra.mxu0 0.0
      %355 = vmatprep.subr.mxu0 0.0
      %356 = vmatpush1.msra.mxu0 0.0
      %357 = vmatprep.subr.mxu0 0.0
      %358 = vmatpush1.msra.mxu0 0.0
      %359 = vmatprep.subr.mxu0 0.0
      %360 = vmatpush1.msra.mxu0 0.0
      %361 = vmatprep.subr.mxu0 0.0
      %362 = vmatpush1.msra.mxu0 0.0
      %363 = vmatprep.subr.mxu0 0.0
      %364 = vmatpush1.msra.mxu0 0.0
      %365 = vmatprep.subr.mxu0 0.0
      %366 = vmatpush1.msra.mxu0 0.0
      %367 = vmatprep.subr.mxu0 0.0
      %368 = vmatpush1.msra.mxu0 0.0
      %369 = vmatprep.subr.mxu0 0.0
      %370 = vmatpush1.msra.mxu0 0.0
      %371 = vmatprep.subr.mxu0 0.0
      %372 = vmatpush1.msra.mxu0 0.0
      %373 = vmatprep.subr.mxu0 0.0
      %374 = vmatpush1.msra.mxu0 0.0
      %375 = vmatprep.subr.mxu0 0.0
      %376 = vmatpush1.msra.mxu0 0.0
      %377 = vmatprep.subr.mxu0 0.0
      %378 = vmatpush1.msra.mxu0 0.0
      %379 = vmatprep.subr.mxu0 0.0
      %380 = vmatpush1.msra.mxu0 0.0
      %381 = vmatprep.subr.mxu0 0.0
      %382 = vmatpush1.msra.mxu0 0.0
      %383 = vmatprep.subr.mxu0 0.0
      %384 = vmatpush1.msra.mxu0 0.0
      %385 = vmatprep.subr.mxu0 0.0
      %386 = vmatpush1.msra.mxu0 0.0
      %387 = vmatprep.subr.mxu0 0.0
      %388 = vmatpush1.msra.mxu0 0.0
      %389 = vmatprep.subr.mxu0 0.0
      %390 = vmatpush1.msra.mxu0 0.0
      %391 = vmatprep.subr.mxu0 0.0
      %392 = vmatpush1.msra.mxu0 0.0
      %393 = vmatprep.mubr.f32.mxu0 0.0
      %394 = vmatmul.mubr.f32.gmra.mrb[0].mxu0 %v313
      %v395 = vpop.f32.mrb[0].mxu0
      %v396 = vadd.f32 %v292, %v395
      %v397 = vpop.f32.mrb[0].mxu0
      %v398 = vadd.f32 %v292, %v397
      %399 = vmatprep.mubr.f32.mxu0 0.0
      %400 = vmatmul.mubr.f32.gmra.mrb[0].mxu0 %v316
      %v401 = vpop.f32.mrb[0].mxu0
      %v402 = vadd.f32 %v297, %v401
      %v403 = vpop.f32.mrb[0].mxu0
      %v404 = vadd.f32 %v297, %v403
      %405 = vmatprep.mubr.f32.mxu0 0.0
      %406 = vmatmul.mubr.f32.gmra.mrb[0].mxu0 %v319
      %v407 = vpop.f32.mrb[0].mxu0
      %v408 = vadd.f32 %v302, %v407
      %v409 = vpop.f32.mrb[0].mxu0
      %v410 = vadd.f32 %v302, %v409
      %411 = vmatprep.mubr.f32.mxu0 0.0
      %412 = vmatmul.mubr.f32.gmra.mrb[0].mxu0 %v322
      %v413 = vpop.f32.mrb[0].mxu0
      %v414 = vadd.f32 %v307, %v413
      %v415 = vpop.f32.mrb[0].mxu0
      %v416 = vadd.f32 %v307, %v415
      %417 = vdwg.mxu0
      %v418 = vmax.f32 %v396, 0.0
      %v419 = vmax.f32 %v398, 0.0
      %v420 = vmax.f32 %v402, 0.0
      %v421 = vmax.f32 %v404, 0.0
      %v422 = vmax.f32 %v408, 0.0
      %v423 = vmax.f32 %v410, 0.0
      %v424 = vmax.f32 %v414, 0.0
      %v425 = vmax.f32 %v416, 0.0
      %v426 = vlaneseq
      %v427 = vand.u32 %v426, 127
      %v428 = vadd.s32 %v427, 128
      %vm429 = vcmp.lt.s32.totalorder %v427, 0
      %v430 = vsub.s32 0, %v427
      %v431 = vsel %vm429, %v430, %v427
      %v432 = vshrl.u32 %v431, 4
      %v433 = vand.u32 %v431, 15
      %v434 = vsub.s32 0, %v433
      %v435 = vsel %vm429, %v434, %v433
      %vm436 = vcmp.lt.s32.totalorder %v428, 0
      %v437 = vsub.s32 0, %v428
      %v438 = vsel %vm436, %v437, %v428
      %v439 = vshrl.u32 %v438, 4
      %v440 = vand.u32 %v438, 15
      %v441 = vsub.s32 0, %v440
      %v442 = vsel %vm436, %v441, %v440
      %vm443 = vcmp.ne.s32.totalorder %v435, 0
      %vm444 = vcmp.ne.s32.totalorder %v442, 0
      %vm445 = vcmp.lt.s32.totalorder %v435, 0
      %vm446 = vcmp.lt.s32.totalorder %v442, 0
      %vm447 = vmand %vm445, %vm443
      %vm448 = vmand %vm446, %vm444
      %v449 = vadd.s32 %v435, 16
      %v450 = vadd.s32 %v442, 16
      %v451 = vsel %vm447, %v449, %v435
      %v452 = vsel %vm448, %v450, %v442
      %vm453 = vcmp.eq.s32.totalorder %v451, 0
      %vm454 = vcmp.eq.s32.totalorder %v452, 0
      %vm455 = vcmp.eq.s32.totalorder %v451, 15
      %vm456 = vcmp.eq.s32.totalorder %v452, 15
      %vm457 = vcmp.lt.s32.totalorder %v427, 16
      %vm458 = vcmp.lt.s32.totalorder %v428, 16
      %vm459 = vcmp.ge.s32.totalorder %v427, 240
      %vm460 = vcmp.ge.s32.totalorder %v428, 240
      %461 = vrot.lane.b32.xlu0 %v418, 1
      %v462 = vpop.permute.xlu0 %461
      %463 = vrot.lane.b32.xlu0 %v420, 1
      %v464 = vpop.permute.xlu0 %463
      %465 = vrot.lane.b32.xlu0 %v422, 1
      %v466 = vpop.permute.xlu0 %465
      %467 = vrot.lane.b32.xlu0 %v424, 1
      %v468 = vpop.permute.xlu0 %467
      %469 = vrot.lane.b32.xlu0 %v419, 1
      %v470 = vpop.permute.xlu0 %469
      %471 = vrot.lane.b32.xlu0 %v421, 1
      %v472 = vpop.permute.xlu0 %471
      %473 = vrot.lane.b32.xlu0 %v423, 1
      %v474 = vpop.permute.xlu0 %473
      %475 = vrot.lane.b32.xlu0 %v425, 1
      %v476 = vpop.permute.xlu0 %475
      %vm477 = vcmp.lt.s32.totalorder %v427, 1
      %v478 = vsel %vm477, %v462, %v470
      %v479 = vsel %vm477, %v464, %v472
      %v480 = vsel %vm477, %v466, %v474
      %v481 = vsel %vm477, %v468, %v476
      %v482 = vsel %vm477, %v470, %v462
      %v483 = vsel %vm477, %v472, %v464
      %v484 = vsel %vm477, %v474, %v466
      %v485 = vsel %vm477, %v476, %v468
      %v486 = vsel %vm453, 1, 0
      %v487 = vsel %vm454, 1, 0
      %vm488 = vcmp.eq.s32.totalorder %v486, 1
      %vm489 = vcmp.eq.s32.totalorder %v487, 1
      %v490 = vsel %vm488, 0.0, %v482
      %v491 = vsel %vm489, 0.0, %v478
      %v492 = vsel %vm488, 0.0, %v483
      %v493 = vsel %vm489, 0.0, %v479
      %v494 = vsel %vm488, 0.0, %v484
      %v495 = vsel %vm489, 0.0, %v480
      %v496 = vsel %vm488, 0.0, %v485
      %v497 = vsel %vm489, 0.0, %v481
      %498 = vrot.lane.b32.xlu0 %v418, 127
      %v499 = vpop.permute.xlu0 %498
      %500 = vrot.lane.b32.xlu0 %v420, 127
      %v501 = vpop.permute.xlu0 %500
      %502 = vrot.lane.b32.xlu0 %v422, 127
      %v503 = vpop.permute.xlu0 %502
      %504 = vrot.lane.b32.xlu0 %v424, 127
      %v505 = vpop.permute.xlu0 %504
      %506 = vrot.lane.b32.xlu0 %v419, 127
      %v507 = vpop.permute.xlu0 %506
      %508 = vrot.lane.b32.xlu0 %v421, 127
      %v509 = vpop.permute.xlu0 %508
      %510 = vrot.lane.b32.xlu0 %v423, 127
      %v511 = vpop.permute.xlu0 %510
      %512 = vrot.lane.b32.xlu0 %v425, 127
      %v513 = vpop.permute.xlu0 %512
      %vm514 = vcmp.lt.s32.totalorder %v427, 127
      %v515 = vsel %vm514, %v499, %v507
      %v516 = vsel %vm514, %v501, %v509
      %v517 = vsel %vm514, %v503, %v511
      %v518 = vsel %vm514, %v505, %v513
      %v519 = vsel %vm514, %v507, %v499
      %v520 = vsel %vm514, %v509, %v501
      %v521 = vsel %vm514, %v511, %v503
      %v522 = vsel %vm514, %v513, %v505
      %v523 = vsel %vm455, 1, 0
      %v524 = vsel %vm456, 1, 0
      %vm525 = vcmp.eq.s32.totalorder %v523, 1
      %vm526 = vcmp.eq.s32.totalorder %v524, 1
      %v527 = vsel %vm525, 0.0, %v515
      %v528 = vsel %vm526, 0.0, %v519
      %v529 = vsel %vm525, 0.0, %v516
      %v530 = vsel %vm526, 0.0, %v520
      %v531 = vsel %vm525, 0.0, %v517
      %v532 = vsel %vm526, 0.0, %v521
      %v533 = vsel %vm525, 0.0, %v518
      %v534 = vsel %vm526, 0.0, %v522
      %535 = vrot.lane.b32.xlu0 %v490, 16
      %v536 = vpop.permute.xlu0 %535
      %537 = vrot.lane.b32.xlu0 %v492, 16
      %v538 = vpop.permute.xlu0 %537
      %539 = vrot.lane.b32.xlu0 %v494, 16
      %v540 = vpop.permute.xlu0 %539
      %541 = vrot.lane.b32.xlu0 %v496, 16
      %v542 = vpop.permute.xlu0 %541
      %543 = vrot.lane.b32.xlu0 %v418, 16
      %v544 = vpop.permute.xlu0 %543
      %545 = vrot.lane.b32.xlu0 %v420, 16
      %v546 = vpop.permute.xlu0 %545
      %547 = vrot.lane.b32.xlu0 %v422, 16
      %v548 = vpop.permute.xlu0 %547
      %549 = vrot.lane.b32.xlu0 %v424, 16
      %v550 = vpop.permute.xlu0 %549
      %551 = vrot.lane.b32.xlu0 %v527, 16
      %v552 = vpop.permute.xlu0 %551
      %553 = vrot.lane.b32.xlu0 %v529, 16
      %v554 = vpop.permute.xlu0 %553
      %555 = vrot.lane.b32.xlu0 %v531, 16
      %v556 = vpop.permute.xlu0 %555
      %557 = vrot.lane.b32.xlu0 %v533, 16
      %v558 = vpop.permute.xlu0 %557
      %559 = vrot.lane.b32.xlu0 %v491, 16
      %v560 = vpop.permute.xlu0 %559
      %561 = vrot.lane.b32.xlu0 %v493, 16
      %v562 = vpop.permute.xlu0 %561
      %563 = vrot.lane.b32.xlu0 %v495, 16
      %v564 = vpop.permute.xlu0 %563
      %565 = vrot.lane.b32.xlu0 %v497, 16
      %v566 = vpop.permute.xlu0 %565
      %567 = vrot.lane.b32.xlu0 %v419, 16
      %v568 = vpop.permute.xlu0 %567
      %569 = vrot.lane.b32.xlu0 %v421, 16
      %v570 = vpop.permute.xlu0 %569
      %571 = vrot.lane.b32.xlu0 %v423, 16
      %v572 = vpop.permute.xlu0 %571
      %573 = vrot.lane.b32.xlu0 %v425, 16
      %v574 = vpop.permute.xlu0 %573
      %575 = vrot.lane.b32.xlu0 %v528, 16
      %v576 = vpop.permute.xlu0 %575
      %577 = vrot.lane.b32.xlu0 %v530, 16
      %v578 = vpop.permute.xlu0 %577
      %579 = vrot.lane.b32.xlu0 %v532, 16
      %v580 = vpop.permute.xlu0 %579
      %581 = vrot.lane.b32.xlu0 %v534, 16
      %v582 = vpop.permute.xlu0 %581
      %v583 = vsel %vm457, %v536, %v560
      %v584 = vsel %vm457, %v538, %v562
      %v585 = vsel %vm457, %v540, %v564
      %v586 = vsel %vm457, %v542, %v566
      %v587 = vsel %vm457, %v544, %v568
      %v588 = vsel %vm457, %v546, %v570
      %v589 = vsel %vm457, %v548, %v572
      %v590 = vsel %vm457, %v550, %v574
      %v591 = vsel %vm457, %v552, %v576
      %v592 = vsel %vm457, %v554, %v578
      %v593 = vsel %vm457, %v556, %v580
      %v594 = vsel %vm457, %v558, %v582
      %v595 = vsel %vm457, %v560, %v536
      %v596 = vsel %vm457, %v562, %v538
      %v597 = vsel %vm457, %v564, %v540
      %v598 = vsel %vm457, %v566, %v542
      %v599 = vsel %vm457, %v568, %v544
      %v600 = vsel %vm457, %v570, %v546
      %v601 = vsel %vm457, %v572, %v548
      %v602 = vsel %vm457, %v574, %v550
      %v603 = vsel %vm457, %v576, %v552
      %v604 = vsel %vm457, %v578, %v554
      %v605 = vsel %vm457, %v580, %v556
      %v606 = vsel %vm457, %v582, %v558
      %v607 = vsel %vm457, 1, 0
      %v608 = vsel %vm458, 1, 0
      %vm609 = vcmp.eq.s32.totalorder %v607, 1
      %vm610 = vcmp.eq.s32.totalorder %v608, 1
      %v611 = vsel %vm609, 0.0, %v595
      %v612 = vsel %vm610, 0.0, %v583
      %v613 = vsel %vm609, 0.0, %v596
      %v614 = vsel %vm610, 0.0, %v584
      %v615 = vsel %vm609, 0.0, %v597
      %v616 = vsel %vm610, 0.0, %v585
      %v617 = vsel %vm609, 0.0, %v598
      %v618 = vsel %vm610, 0.0, %v586
      %v619 = vsel %vm609, 0.0, %v599
      %v620 = vsel %vm610, 0.0, %v587
      %v621 = vsel %vm609, 0.0, %v600
      %v622 = vsel %vm610, 0.0, %v588
      %v623 = vsel %vm609, 0.0, %v601
      %v624 = vsel %vm610, 0.0, %v589
      %v625 = vsel %vm609, 0.0, %v602
      %v626 = vsel %vm610, 0.0, %v590
      %v627 = vsel %vm609, 0.0, %v603
      %v628 = vsel %vm610, 0.0, %v591
      %v629 = vsel %vm609, 0.0, %v604
      %v630 = vsel %vm610, 0.0, %v592
      %v631 = vsel %vm609, 0.0, %v605
      %v632 = vsel %vm610, 0.0, %v593
      %v633 = vsel %vm609, 0.0, %v606
      %v634 = vsel %vm610, 0.0, %v594
      %v635 = vld [vmem:[%s3] sm:$0xf]
      %v636 = vld [vmem:[%s3 + $0x4] sm:$0xf]
      %v637 = vld [vmem:[%s3 + $0x8] sm:$0xf]
      %v638 = vld [vmem:[%s3 + $0xc] sm:$0xf]
      %v639 = vpack.c.bf16 %v613, %v611
      %v640 = vpack.c.bf16 %v614, %v612
      %v641 = vpack.c.bf16 %v617, %v615
      %v642 = vpack.c.bf16 %v618, %v616
      %v643 = vpack.c.bf16 %v621, %v619
      %v644 = vpack.c.bf16 %v622, %v620
      %v645 = vpack.c.bf16 %v625, %v623
      %v646 = vpack.c.bf16 %v626, %v624
      %v647 = vpack.c.bf16 %v629, %v627
      %v648 = vpack.c.bf16 %v630, %v628
      %v649 = vpack.c.bf16 %v633, %v631
      %v650 = vpack.c.bf16 %v634, %v632
      %s651 = scalar_lea.vmem %s3, 16
      %v652 = vld [vmem:[%s651] sm:$0xf]
      %v653 = vld [vmem:[%s651 + $0x4] sm:$0xf]
      %v654 = vld [vmem:[%s651 + $0x8] sm:$0xf]
      %v655 = vld [vmem:[%s651 + $0xc] sm:$0xf]
      %v656 = vpack.c.bf16 %v492, %v490
      %v657 = vpack.c.bf16 %v493, %v491
      %v658 = vpack.c.bf16 %v496, %v494
      %v659 = vpack.c.bf16 %v497, %v495
      %v660 = vpack.c.bf16 %v420, %v418
      %v661 = vpack.c.bf16 %v421, %v419
      %v662 = vpack.c.bf16 %v424, %v422
      %v663 = vpack.c.bf16 %v425, %v423
      %v664 = vpack.c.bf16 %v529, %v527
      %v665 = vpack.c.bf16 %v530, %v528
      %v666 = vpack.c.bf16 %v533, %v531
      %v667 = vpack.c.bf16 %v534, %v532
      %v672 = vunpack.c.l.b16 %v652
      %v673 = vunpack.c.l.b16 %v653
      %v674 = vunpack.c.l.b16 %v654
      %v675 = vunpack.c.l.b16 %v655
      %v676 = vpack.c.b16 %v673, %v672
      %v677 = vpack.c.b16 %v675, %v674
      %vm678 = vcmask 785408
      %v680 = vsel %vm678, %v676, 0
      %v683 = vsel %vm678, %v677, 0
      %685 = vmatprep.subr.bf16.mxu0 %v657
      %686 = vmatpush1.bf16.msra.mxu0 %v656
      %687 = vmatprep.subr.bf16.mxu0 %v659
      %688 = vmatpush1.bf16.msra.mxu0 %v658
      %689 = vmatprep.subr.bf16.mxu0 %v661
      %690 = vmatpush1.bf16.msra.mxu0 %v660
      %691 = vmatprep.subr.bf16.mxu0 %v663
      %692 = vmatpush1.bf16.msra.mxu0 %v662
      %693 = vmatprep.subr.bf16.mxu0 %v665
      %694 = vmatpush1.bf16.msra.mxu0 %v664
      %695 = vmatprep.subr.bf16.mxu0 %v667
      %696 = vmatpush1.bf16.msra.mxu0 %v666
      %697 = vmatprep.subr.bf16.mxu0 0
      %698 = vmatpush1.bf16.msra.mxu0 0
      %699 = vmatprep.subr.bf16.mxu0 0
      %700 = vmatpush1.bf16.msra.mxu0 0
      %701 = vmatprep.subr.bf16.mxu0 0
      %702 = vmatpush1.bf16.msra.mxu0 0
      %703 = vmatprep.subr.bf16.mxu0 0
      %704 = vmatpush1.bf16.msra.mxu0 0
      %705 = vmatprep.subr.bf16.mxu0 0
      %706 = vmatpush1.bf16.msra.mxu0 0
      %707 = vmatprep.subr.bf16.mxu0 0
      %708 = vmatpush1.bf16.msra.mxu0 0
      %709 = vmatprep.subr.bf16.mxu0 0
      %710 = vmatpush1.bf16.msra.mxu0 0
      %711 = vmatprep.subr.bf16.mxu0 0
      %712 = vmatpush1.bf16.msra.mxu0 0
      %713 = vmatprep.subr.bf16.mxu0 0
      %714 = vmatpush1.bf16.msra.mxu0 0
      %715 = vmatprep.subr.bf16.mxu0 0
      %716 = vmatpush1.bf16.msra.mxu0 0
      %717 = vmatprep.mubr.bf16.mxu0 0
      %718 = vmatmul.mubr.bf16.gmra.mrb[0].mxu0 %v680
      %v719 = vpop.f32.mrb[0].mxu0
      %v720 = vadd.f32 0.0, %v719
      %v721 = vpop.f32.mrb[0].mxu0
      %v722 = vadd.f32 0.0, %v721
      %v723 = vpop.f32.mrb[0].mxu0
      %v724 = vadd.f32 0.0, %v723
      %v725 = vpop.f32.mrb[0].mxu0
      %v726 = vadd.f32 0.0, %v725
      %727 = vmatprep.mubr.bf16.mxu0 0
      %728 = vmatmul.mubr.bf16.gmra.mrb[0].mxu0 %v683
      %v729 = vpop.f32.mrb[0].mxu0
      %v730 = vadd.f32 0.0, %v729
      %v731 = vpop.f32.mrb[0].mxu0
      %v732 = vadd.f32 0.0, %v731
      %v733 = vpop.f32.mrb[0].mxu0
      %v734 = vadd.f32 0.0, %v733
      %v735 = vpop.f32.mrb[0].mxu0
      %v736 = vadd.f32 0.0, %v735
      %737 = vdwg.mxu0
      %v742 = vunpack.c.l.b16 %v635
      %v743 = vunpack.c.l.b16 %v636
      %v744 = vunpack.c.l.b16 %v637
      %v745 = vunpack.c.l.b16 %v638
      %v746 = vpack.c.b16 %v743, %v742
      %v747 = vpack.c.b16 %v745, %v744
      %v749 = vsel %vm678, %v746, 0
      %v752 = vsel %vm678, %v747, 0
      %754 = vmatprep.subr.bf16.mxu0 %v640
      %755 = vmatpush1.bf16.msra.mxu0 %v639
      %756 = vmatprep.subr.bf16.mxu0 %v642
      %757 = vmatpush1.bf16.msra.mxu0 %v641
      %758 = vmatprep.subr.bf16.mxu0 %v644
      %759 = vmatpush1.bf16.msra.mxu0 %v643
      %760 = vmatprep.subr.bf16.mxu0 %v646
      %761 = vmatpush1.bf16.msra.mxu0 %v645
      %762 = vmatprep.subr.bf16.mxu0 %v648
      %763 = vmatpush1.bf16.msra.mxu0 %v647
      %764 = vmatprep.subr.bf16.mxu0 %v650
      %765 = vmatpush1.bf16.msra.mxu0 %v649
      %766 = vmatprep.subr.bf16.mxu0 0
      %767 = vmatpush1.bf16.msra.mxu0 0
      %768 = vmatprep.subr.bf16.mxu0 0
      %769 = vmatpush1.bf16.msra.mxu0 0
      %770 = vmatprep.subr.bf16.mxu0 0
      %771 = vmatpush1.bf16.msra.mxu0 0
      %772 = vmatprep.subr.bf16.mxu0 0
      %773 = vmatpush1.bf16.msra.mxu0 0
      %774 = vmatprep.subr.bf16.mxu0 0
      %775 = vmatpush1.bf16.msra.mxu0 0
      %776 = vmatprep.subr.bf16.mxu0 0
      %777 = vmatpush1.bf16.msra.mxu0 0
      %778 = vmatprep.subr.bf16.mxu0 0
      %779 = vmatpush1.bf16.msra.mxu0 0
      %780 = vmatprep.subr.bf16.mxu0 0
      %781 = vmatpush1.bf16.msra.mxu0 0
      %782 = vmatprep.subr.bf16.mxu0 0
      %783 = vmatpush1.bf16.msra.mxu0 0
      %784 = vmatprep.subr.bf16.mxu0 0
      %785 = vmatpush1.bf16.msra.mxu0 0
      %786 = vmatprep.mubr.bf16.mxu0 0
      %787 = vmatmul.mubr.bf16.gmra.mrb[0].mxu0 %v749
      %v788 = vpop.f32.mrb[0].mxu0
      %v789 = vadd.f32 %v720, %v788
      %v790 = vpop.f32.mrb[0].mxu0
      %v791 = vadd.f32 %v722, %v790
      %v792 = vpop.f32.mrb[0].mxu0
      %v793 = vadd.f32 %v724, %v792
      %v794 = vpop.f32.mrb[0].mxu0
      %v795 = vadd.f32 %v726, %v794
      %796 = vmatprep.mubr.bf16.mxu0 0
      %797 = vmatmul.mubr.bf16.gmra.mrb[0].mxu0 %v752
      %v798 = vpop.f32.mrb[0].mxu0
      %v799 = vadd.f32 %v730, %v798
      %v800 = vpop.f32.mrb[0].mxu0
      %v801 = vadd.f32 %v732, %v800
      %v802 = vpop.f32.mrb[0].mxu0
      %v803 = vadd.f32 %v734, %v802
      %v804 = vpop.f32.mrb[0].mxu0
      %v805 = vadd.f32 %v736, %v804
      %806 = vdwg.mxu0
      %807 = vrot.lane.b32.xlu0 %v490, 112
      %v808 = vpop.permute.xlu0 %807
      %809 = vrot.lane.b32.xlu0 %v492, 112
      %v810 = vpop.permute.xlu0 %809
      %811 = vrot.lane.b32.xlu0 %v494, 112
      %v812 = vpop.permute.xlu0 %811
      %813 = vrot.lane.b32.xlu0 %v496, 112
      %v814 = vpop.permute.xlu0 %813
      %815 = vrot.lane.b32.xlu0 %v418, 112
      %v816 = vpop.permute.xlu0 %815
      %817 = vrot.lane.b32.xlu0 %v420, 112
      %v818 = vpop.permute.xlu0 %817
      %819 = vrot.lane.b32.xlu0 %v422, 112
      %v820 = vpop.permute.xlu0 %819
      %821 = vrot.lane.b32.xlu0 %v424, 112
      %v822 = vpop.permute.xlu0 %821
      %823 = vrot.lane.b32.xlu0 %v527, 112
      %v824 = vpop.permute.xlu0 %823
      %825 = vrot.lane.b32.xlu0 %v529, 112
      %v826 = vpop.permute.xlu0 %825
      %827 = vrot.lane.b32.xlu0 %v531, 112
      %v828 = vpop.permute.xlu0 %827
      %829 = vrot.lane.b32.xlu0 %v533, 112
      %v830 = vpop.permute.xlu0 %829
      %831 = vrot.lane.b32.xlu0 %v491, 112
      %v832 = vpop.permute.xlu0 %831
      %833 = vrot.lane.b32.xlu0 %v493, 112
      %v834 = vpop.permute.xlu0 %833
      %835 = vrot.lane.b32.xlu0 %v495, 112
      %v836 = vpop.permute.xlu0 %835
      %837 = vrot.lane.b32.xlu0 %v497, 112
      %v838 = vpop.permute.xlu0 %837
      %839 = vrot.lane.b32.xlu0 %v419, 112
      %v840 = vpop.permute.xlu0 %839
      %841 = vrot.lane.b32.xlu0 %v421, 112
      %v842 = vpop.permute.xlu0 %841
      %843 = vrot.lane.b32.xlu0 %v423, 112
      %v844 = vpop.permute.xlu0 %843
      %845 = vrot.lane.b32.xlu0 %v425, 112
      %v846 = vpop.permute.xlu0 %845
      %847 = vrot.lane.b32.xlu0 %v528, 112
      %v848 = vpop.permute.xlu0 %847
      %849 = vrot.lane.b32.xlu0 %v530, 112
      %v850 = vpop.permute.xlu0 %849
      %851 = vrot.lane.b32.xlu0 %v532, 112
      %v852 = vpop.permute.xlu0 %851
      %853 = vrot.lane.b32.xlu0 %v534, 112
      %v854 = vpop.permute.xlu0 %853
      %vm855 = vcmp.lt.s32.totalorder %v427, 112
      %v856 = vsel %vm855, %v808, %v832
      %v857 = vsel %vm855, %v810, %v834
      %v858 = vsel %vm855, %v812, %v836
      %v859 = vsel %vm855, %v814, %v838
      %v860 = vsel %vm855, %v816, %v840
      %v861 = vsel %vm855, %v818, %v842
      %v862 = vsel %vm855, %v820, %v844
      %v863 = vsel %vm855, %v822, %v846
      %v864 = vsel %vm855, %v824, %v848
      %v865 = vsel %vm855, %v826, %v850
      %v866 = vsel %vm855, %v828, %v852
      %v867 = vsel %vm855, %v830, %v854
      %v868 = vsel %vm855, %v832, %v808
      %v869 = vsel %vm855, %v834, %v810
      %v870 = vsel %vm855, %v836, %v812
      %v871 = vsel %vm855, %v838, %v814
      %v872 = vsel %vm855, %v840, %v816
      %v873 = vsel %vm855, %v842, %v818
      %v874 = vsel %vm855, %v844, %v820
      %v875 = vsel %vm855, %v846, %v822
      %v876 = vsel %vm855, %v848, %v824
      %v877 = vsel %vm855, %v850, %v826
      %v878 = vsel %vm855, %v852, %v828
      %v879 = vsel %vm855, %v854, %v830
      %v880 = vsel %vm459, 1, 0
      %v881 = vsel %vm460, 1, 0
      %vm882 = vcmp.eq.s32.totalorder %v880, 1
      %vm883 = vcmp.eq.s32.totalorder %v881, 1
      %v884 = vsel %vm882, 0.0, %v856
      %v885 = vsel %vm883, 0.0, %v868
      %v886 = vsel %vm882, 0.0, %v857
      %v887 = vsel %vm883, 0.0, %v869
      %v888 = vsel %vm882, 0.0, %v858
      %v889 = vsel %vm883, 0.0, %v870
      %v890 = vsel %vm882, 0.0, %v859
      %v891 = vsel %vm883, 0.0, %v871
      %v892 = vsel %vm882, 0.0, %v860
      %v893 = vsel %vm883, 0.0, %v872
      %v894 = vsel %vm882, 0.0, %v861
      %v895 = vsel %vm883, 0.0, %v873
      %v896 = vsel %vm882, 0.0, %v862
      %v897 = vsel %vm883, 0.0, %v874
      %v898 = vsel %vm882, 0.0, %v863
      %v899 = vsel %vm883, 0.0, %v875
      %v900 = vsel %vm882, 0.0, %v864
      %v901 = vsel %vm883, 0.0, %v876
      %v902 = vsel %vm882, 0.0, %v865
      %v903 = vsel %vm883, 0.0, %v877
      %v904 = vsel %vm882, 0.0, %v866
      %v905 = vsel %vm883, 0.0, %v878
      %v906 = vsel %vm882, 0.0, %v867
      %v907 = vsel %vm883, 0.0, %v879
      %s908 = scalar_lea.vmem %s3, 32
      %v909 = vld [vmem:[%s908] sm:$0xf]
      %v910 = vld [vmem:[%s908 + $0x4] sm:$0xf]
      %v911 = vld [vmem:[%s908 + $0x8] sm:$0xf]
      %v912 = vld [vmem:[%s908 + $0xc] sm:$0xf]
      %v913 = vpack.c.bf16 %v886, %v884
      %v914 = vpack.c.bf16 %v887, %v885
      %v915 = vpack.c.bf16 %v890, %v888
      %v916 = vpack.c.bf16 %v891, %v889
      %v917 = vpack.c.bf16 %v894, %v892
      %v918 = vpack.c.bf16 %v895, %v893
      %v919 = vpack.c.bf16 %v898, %v896
      %v920 = vpack.c.bf16 %v899, %v897
      %v921 = vpack.c.bf16 %v902, %v900
      %v922 = vpack.c.bf16 %v903, %v901
      %v923 = vpack.c.bf16 %v906, %v904
      %v924 = vpack.c.bf16 %v907, %v905
      %v929 = vunpack.c.l.b16 %v909
      %v930 = vunpack.c.l.b16 %v910
      %v931 = vunpack.c.l.b16 %v911
      %v932 = vunpack.c.l.b16 %v912
      %v933 = vpack.c.b16 %v930, %v929
      %v934 = vpack.c.b16 %v932, %v931
      %v936 = vsel %vm678, %v933, 0
      %v939 = vsel %vm678, %v934, 0
      %941 = vmatprep.subr.bf16.mxu0 %v914
      %942 = vmatpush1.bf16.msra.mxu0 %v913
      %943 = vmatprep.subr.bf16.mxu0 %v916
      %944 = vmatpush1.bf16.msra.mxu0 %v915
      %945 = vmatprep.subr.bf16.mxu0 %v918
      %946 = vmatpush1.bf16.msra.mxu0 %v917
      %947 = vmatprep.subr.bf16.mxu0 %v920
      %948 = vmatpush1.bf16.msra.mxu0 %v919
      %949 = vmatprep.subr.bf16.mxu0 %v922
      %950 = vmatpush1.bf16.msra.mxu0 %v921
      %951 = vmatprep.subr.bf16.mxu0 %v924
      %952 = vmatpush1.bf16.msra.mxu0 %v923
      %953 = vmatprep.subr.bf16.mxu0 0
      %954 = vmatpush1.bf16.msra.mxu0 0
      %955 = vmatprep.subr.bf16.mxu0 0
      %956 = vmatpush1.bf16.msra.mxu0 0
      %957 = vmatprep.subr.bf16.mxu0 0
      %958 = vmatpush1.bf16.msra.mxu0 0
      %959 = vmatprep.subr.bf16.mxu0 0
      %960 = vmatpush1.bf16.msra.mxu0 0
      %961 = vmatprep.subr.bf16.mxu0 0
      %962 = vmatpush1.bf16.msra.mxu0 0
      %963 = vmatprep.subr.bf16.mxu0 0
      %964 = vmatpush1.bf16.msra.mxu0 0
      %965 = vmatprep.subr.bf16.mxu0 0
      %966 = vmatpush1.bf16.msra.mxu0 0
      %967 = vmatprep.subr.bf16.mxu0 0
      %968 = vmatpush1.bf16.msra.mxu0 0
      %969 = vmatprep.subr.bf16.mxu0 0
      %970 = vmatpush1.bf16.msra.mxu0 0
      %971 = vmatprep.subr.bf16.mxu0 0
      %972 = vmatpush1.bf16.msra.mxu0 0
      %973 = vmatprep.mubr.bf16.mxu0 0
      %974 = vmatmul.mubr.bf16.gmra.mrb[0].mxu0 %v936
      %v975 = vpop.f32.mrb[0].mxu0
      %v976 = vadd.f32 0.0, %v975
      %v977 = vpop.f32.mrb[0].mxu0
      %v978 = vadd.f32 0.0, %v977
      %v979 = vpop.f32.mrb[0].mxu0
      %v980 = vadd.f32 0.0, %v979
      %v981 = vpop.f32.mrb[0].mxu0
      %v982 = vadd.f32 0.0, %v981
      %983 = vmatprep.mubr.bf16.mxu0 0
      %984 = vmatmul.mubr.bf16.gmra.mrb[0].mxu0 %v939
      %v985 = vpop.f32.mrb[0].mxu0
      %v986 = vadd.f32 0.0, %v985
      %v987 = vpop.f32.mrb[0].mxu0
      %v988 = vadd.f32 0.0, %v987
      %v989 = vpop.f32.mrb[0].mxu0
      %v990 = vadd.f32 0.0, %v989
      %v991 = vpop.f32.mrb[0].mxu0
      %v992 = vadd.f32 0.0, %v991
      %993 = vdwg.mxu0
      %v994 = vadd.f32 %v789, %v976
      %v995 = vadd.f32 %v791, %v978
      %v996 = vadd.f32 %v793, %v980
      %v997 = vadd.f32 %v795, %v982
      %v998 = vadd.f32 %v799, %v986
      %v999 = vadd.f32 %v801, %v988
      %v1000 = vadd.f32 %v803, %v990
      %v1001 = vadd.f32 %v805, %v992
      %v1002 = vld [vmem:[%s4] sm:$0xff]
      %v1003 = vld [vmem:[%s4 + $0x8] sm:$0xff]
      %v1004 = vld [vmem:[%s4 + $0x10] sm:$0xff]
      %v1005 = vld [vmem:[%s4 + $0x18] sm:$0xff]
      %1007 = vset.pattern.permute.xlu0 0
      %1008 = vperm.xlu0 %1007, %v1002
      %v1009 = vpop.permute.xlu0 %1008
      %1012 = vset.pattern.permute.xlu0 0
      %1013 = vperm.xlu0 %1012, %v1003
      %v1014 = vpop.permute.xlu0 %1013
      %1017 = vset.pattern.permute.xlu0 0
      %1018 = vperm.xlu0 %1017, %v1004
      %v1019 = vpop.permute.xlu0 %1018
      %1022 = vset.pattern.permute.xlu0 0
      %1023 = vperm.xlu0 %1022, %v1005
      %v1024 = vpop.permute.xlu0 %1023
      %v1026 = vadd.f32 %v994, %v1009
      %v1027 = vadd.f32 %v995, %v1009
      %v1028 = vadd.f32 %v996, %v1014
      %v1029 = vadd.f32 %v997, %v1014
      %v1030 = vadd.f32 %v998, %v1019
      %v1031 = vadd.f32 %v999, %v1019
      %v1032 = vadd.f32 %v1000, %v1024
      %v1033 = vadd.f32 %v1001, %v1024
      %v1034 = vmax.f32 %v1026, 0.0
      %v1035 = vmax.f32 %v1027, 0.0
      %v1036 = vmax.f32 %v1028, 0.0
      %v1037 = vmax.f32 %v1029, 0.0
      %v1038 = vmax.f32 %v1030, 0.0
      %v1039 = vmax.f32 %v1031, 0.0
      %v1040 = vmax.f32 %v1032, 0.0
      %v1041 = vmax.f32 %v1033, 0.0
      %v1042 = vld [vmem:[%s5] sm:$0xff]
      %v1043 = vld [vmem:[%s5 + $0x8] sm:$0x3]
      %vm1044 = vcmask 261120
      %v1046 = vsel %vm1044, %v1042, 0
      %v1049 = vsel %vm1044, %v1043, 0
      %1051 = vmatprep.subr.mxu0 %v1035
      %1052 = vmatpush1.msra.mxu0 %v1034
      %1053 = vmatprep.subr.mxu0 %v1037
      %1054 = vmatpush1.msra.mxu0 %v1036
      %1055 = vmatprep.subr.mxu0 %v1039
      %1056 = vmatpush1.msra.mxu0 %v1038
      %1057 = vmatprep.subr.mxu0 %v1041
      %1058 = vmatpush1.msra.mxu0 %v1040
      %1059 = vmatprep.subr.mxu0 0.0
      %1060 = vmatpush1.msra.mxu0 0.0
      %1061 = vmatprep.subr.mxu0 0.0
      %1062 = vmatpush1.msra.mxu0 0.0
      %1063 = vmatprep.subr.mxu0 0.0
      %1064 = vmatpush1.msra.mxu0 0.0
      %1065 = vmatprep.subr.mxu0 0.0
      %1066 = vmatpush1.msra.mxu0 0.0
      %1067 = vmatprep.subr.mxu0 0.0
      %1068 = vmatpush1.msra.mxu0 0.0
      %1069 = vmatprep.subr.mxu0 0.0
      %1070 = vmatpush1.msra.mxu0 0.0
      %1071 = vmatprep.subr.mxu0 0.0
      %1072 = vmatpush1.msra.mxu0 0.0
      %1073 = vmatprep.subr.mxu0 0.0
      %1074 = vmatpush1.msra.mxu0 0.0
      %1075 = vmatprep.subr.mxu0 0.0
      %1076 = vmatpush1.msra.mxu0 0.0
      %1077 = vmatprep.subr.mxu0 0.0
      %1078 = vmatpush1.msra.mxu0 0.0
      %1079 = vmatprep.subr.mxu0 0.0
      %1080 = vmatpush1.msra.mxu0 0.0
      %1081 = vmatprep.subr.mxu0 0.0
      %1082 = vmatpush1.msra.mxu0 0.0
      %1083 = vmatprep.subr.mxu0 0.0
      %1084 = vmatpush1.msra.mxu0 0.0
      %1085 = vmatprep.subr.mxu0 0.0
      %1086 = vmatpush1.msra.mxu0 0.0
      %1087 = vmatprep.subr.mxu0 0.0
      %1088 = vmatpush1.msra.mxu0 0.0
      %1089 = vmatprep.subr.mxu0 0.0
      %1090 = vmatpush1.msra.mxu0 0.0
      %1091 = vmatprep.subr.mxu0 0.0
      %1092 = vmatpush1.msra.mxu0 0.0
      %1093 = vmatprep.subr.mxu0 0.0
      %1094 = vmatpush1.msra.mxu0 0.0
      %1095 = vmatprep.subr.mxu0 0.0
      %1096 = vmatpush1.msra.mxu0 0.0
      %1097 = vmatprep.subr.mxu0 0.0
      %1098 = vmatpush1.msra.mxu0 0.0
      %1099 = vmatprep.subr.mxu0 0.0
      %1100 = vmatpush1.msra.mxu0 0.0
      %1101 = vmatprep.subr.mxu0 0.0
      %1102 = vmatpush1.msra.mxu0 0.0
      %1103 = vmatprep.subr.mxu0 0.0
      %1104 = vmatpush1.msra.mxu0 0.0
      %1105 = vmatprep.subr.mxu0 0.0
      %1106 = vmatpush1.msra.mxu0 0.0
      %1107 = vmatprep.subr.mxu0 0.0
      %1108 = vmatpush1.msra.mxu0 0.0
      %1109 = vmatprep.subr.mxu0 0.0
      %1110 = vmatpush1.msra.mxu0 0.0
      %1111 = vmatprep.subr.mxu0 0.0
      %1112 = vmatpush1.msra.mxu0 0.0
      %1113 = vmatprep.subr.mxu0 0.0
      %1114 = vmatpush1.msra.mxu0 0.0
      %1115 = vmatprep.mubr.f32.mxu0 0.0
      %1116 = vmatmul.mubr.f32.gmra.mrb[0].mxu0 %v1046
      %v1117 = vpop.f32.mrb[0].mxu0
      %v1118 = vadd.f32 0.0, %v1117
      %v1119 = vpop.f32.mrb[0].mxu0
      %v1120 = vadd.f32 0.0, %v1119
      %1121 = vmatprep.mubr.f32.mxu0 0.0
      %1122 = vmatmul.mubr.f32.gmra.mrb[0].mxu0 %v1049
      %v1123 = vpop.f32.mrb[0].mxu0
      %v1124 = vadd.f32 0.0, %v1123
      %v1125 = vpop.f32.mrb[0].mxu0
      %v1126 = vadd.f32 0.0, %v1125
      %1127 = vdwg.mxu0
      %v1128 = vadd.f32 %v1118, %v1120
      %1129 = vadd.xlane.f32.xlu0 %v1128
      %v1130 = vpop.xlane.xlu0 %1129
      %vm1131 = vcmask 1041408
      %v1132 = vsel %vm1131, %v1124, 0.0
      %v1133 = vsel %vm1131, %v1126, 0.0
      %v1134 = vadd.f32 %v1132, %v1133
      %1135 = vadd.xlane.f32.xlu0 %v1134
      %v1136 = vpop.xlane.xlu0 %1135
      %v1137 = vld [vmem:[%s6] sm:$0xff]
      %v1138 = vld [vmem:[%s6 + $0x8] sm:$0x3]
      %v1139 = vadd.f32 %v1130, %v1137
      %v1140 = vadd.f32 %v1136, %v1138
      %vm1141 = vcmask 7168
      %1142 = vst.msk [vmem:[%s278] sm:$0xff] %vm1141, %v1139
      %vm1143 = vcmask 1024
      %1144 = vst.msk [vmem:[%s278 + $0x8] sm:$0x3] %vm1143, %v1140
      %p1145 = scmp.lt.s32.totalorder %s18, 1
      %s1146 = scalar_select %p1145, %s18, 1
      %s1147 = smul.addr %s1146, 2
      %s1148 = smul.addr %s1147, 8
      %s1149 = scalar_lea.vmem %s7, %s1148
      // Predicated region
      $region49: #{projnet_forward.1} parent=47 // pred_check
        %p1150 = pneg %p188
      $region50: #{projnet_forward.1} parent=47 // pred_check_branch
        %1152 = sbr.rel (%p1150) target = $region52
      $region51: #{projnet_forward.1} parent=47 // pred_region
        _
      $region52: #{projnet_forward.1} parent=47 // pred_fallthru
        _
    $region48: #{projnet_forward.1} parent=5 // pred_fallthru
      _
    %p1153 = scmp.le.s32.totalorder 2, %s13
    // Predicated region
    $region53: #{projnet_forward.1} parent=5 // pred_check
      %p1154 = pneg %p1153
    $region54: #{projnet_forward.1} parent=5 // pred_check_branch
      %1156 = sbr.rel (%p1154) target = $region56
    $region55: #{projnet_forward.1} parent=5 // pred_region
      %s1157 = ssub.s32 %s13, 2
      // Predicated region
      $region57: #{projnet_forward.1} parent=55 // pred_check
        %p1158 = pneg %p194
      $region58: #{projnet_forward.1} parent=55 // pred_check_branch
        %1160 = sbr.rel (%p1158) target = $region60
      $region59: #{projnet_forward.1} parent=55 // pred_region
        %p1161 = scmp.lt.s32.totalorder %s19, 1
        %s1162 = scalar_select %p1161, %s19, 1
        %s1163 = smul.addr %s1162, 2
        %s1164 = smul.addr %s1163, 8
        %s1165 = scalar_lea.vmem %s7, %s1164
      $region60: #{projnet_forward.1} parent=55 // pred_fallthru
        _
    $region56: #{projnet_forward.1} parent=5 // pred_fallthru
      _
  $region6: #{projnet_forward.1} parent=0 // loop_footer
    %s17 = sadd.s32 1, %s13
  $region7: #{projnet_forward.1} parent=0 // loop_footer_branch
    %12 = sbr.rel target = $region3
  $region8: #{projnet_forward.1} parent=0 // loop_exit
    _

</llo_original>
